<compile_context>
chip_gen: v7x
topology: tpu7x:2x2x1
jax: 0.10.0
libtpu: 0.0.40
codegen_flags: <defaults>
</compile_context>

<pallas_src>
import functools

import jax
import jax.numpy as jnp
from jax import lax
from jax.experimental import pallas as pl
from jax.experimental.pallas import tpu as pltpu


def _round_up(a, b):
    return ((a + b - 1) // b) * b


def _cdiv(a, b):
    return (a + b - 1) // b


def _rbf_func_kernel(x_ref, xx_ref, x2h_ref, xx2h_ref, o_ref):
    """o[m, n] = exp(min(x_m . xx_n + x2h[m] + xx2h[n], 0))."""
    # cross term on the MXU, contracting the feature dim
    dot = lax.dot_general(
        x_ref[...], xx_ref[...],
        dimension_numbers=(((1,), (1,)), ((), ())),
        preferred_element_type=jnp.float32,
    )                                                   # (TM, TN) f32
    # folded half-norms: arg = -0.5 * ||x_m - xx_n||^2
    arg = dot + x2h_ref[...] + xx2h_ref[...]
    # cancellation hygiene: squared distance can't be negative -> arg <= 0
    o_ref[...] = jnp.exp(jnp.minimum(arg, 0.0)).astype(o_ref.dtype)


def _atleast2d(t):
    """JAX analogue of atleast2d(..., force2d=True): (m, ...) -> (m, prod)."""
    t = jnp.asarray(t)
    if t.ndim < 2:
        return t.reshape(-1, 1)
    return t.reshape(t.shape[0], -1)


def _choose_tiles(M, N, D_pad, in_bytes, tm, tn):
    """Lane/sublane friendly tiles that fit a cross-chip-safe VMEM budget."""
    TM = M if M <= tm else tm          # tm is a multiple of 8 when it tiles M
    TN = N if N <= tn else tn          # tn is a multiple of 128 when it tiles N

    def per_copy_bytes(a, b):
        # one copy of the working set; the Pallas pipeline double-buffers (x2)
        return (a * D_pad * in_bytes + b * D_pad * in_bytes
                + a * b * 4 + a * 128 * 4 + 8 * b * 4)

    budget = 20 * 1024 * 1024          # ~40 MiB double-buffered (safe on v7x)
    # shrink the M tile first: keeps the output lane dim large -> unmasked vst
    while per_copy_bytes(TM, TN) > budget and TM > 256:
        TM = max(256, _round_up(TM // 2, 8))
    while per_copy_bytes(TM, TN) > budget and TN > 256:
        TN = max(256, _round_up(TN // 2, 128))

    # v7x has 2 TensorCores: a single-tile problem would leave one idle, so
    # split large single-tile grids into >= 2 parallel blocks (no-op v5e/v6e).
    if _cdiv(M, TM) * _cdiv(N, TN) == 1:
        if M >= 512:
            TM = _round_up(_cdiv(M, 2), 8)
        elif N >= 512:
            TN = _round_up(_cdiv(N, 2), 128)
    return TM, TN, per_copy_bytes(TM, TN)


@functools.partial(
    jax.jit,
    static_argnames=("method", "use_bf16_matmul", "out_dtype", "tm", "tn"))
def kernel_forward(x, xx=None, method="func", *, use_bf16_matmul=False,
                   out_dtype=jnp.float32, tm=1024, tn=1024):
    """Pallas-backed analogue of Kernel.forward(x, xx, diag=False, method='func')."""
    assert method == "func", "only the default method='func' is implemented"
    x2d = _atleast2d(x).astype(jnp.float32)
    self_kernel = xx is None
    xx2d = x2d if self_kernel else _atleast2d(xx).astype(jnp.float32)
    M, D = x2d.shape
    N, D2 = xx2d.shape
    assert D == D2

    # folded half-norms, computed once in f32 (before any bf16 cast):
    #   arg[m, n] = x_m . xx_n + x2h[m] + xx2h[n]
    x2h = -0.5 * jnp.sum(x2d * x2d, axis=1, keepdims=True)              # (M, 1)
    xx2h = (x2h.T if self_kernel
            else -0.5 * jnp.sum(xx2d * xx2d, axis=1, keepdims=True).T)  # (1, N)

    # lane-align only the contraction dim (zero columns don't change distances);
    # no M/N padding: ragged edge blocks are masked by the Pallas pipeline.
    D_pad = _round_up(D, 128)

    def _prep(a):
        if D_pad != D:
            a = jnp.pad(a, ((0, 0), (0, D_pad - D)))
        if use_bf16_matmul:
            a = a.astype(jnp.bfloat16)   # halves HBM reads / tile VMEM
        return a

    x_in = _prep(x2d)
    xx_in = x_in if self_kernel else _prep(xx2d)

    if M > tm:
        assert tm % 8 == 0, "tm must be a multiple of 8 when it tiles M"
    if N > tn:
        assert tn % 128 == 0, "tn must be a multiple of 128 when it tiles N"

    in_bytes = 2 if use_bf16_matmul else 4
    TM, TN, per_copy = _choose_tiles(M, N, D_pad, in_bytes, tm, tn)
    gm, gn = _cdiv(M, TM), _cdiv(N, TN)

    # The operand indexed by the inner grid axis is re-read once per outer
    # block; put the smaller re-streamed volume on the inner axis.
    if gm * N <= gn * M:
        grid = (gm, gn)                       # M outer, N inner: xx re-streamed
        x_map = lambda i, j: (i, 0)
        xx_map = lambda i, j: (j, 0)
        x2_map = lambda i, j: (i, 0)
        xx2_map = lambda i, j: (0, j)
        o_map = lambda i, j: (i, j)
    else:
        grid = (gn, gm)                       # N outer, M inner: x re-streamed
        x_map = lambda j, i: (i, 0)
        xx_map = lambda j, i: (j, 0)
        x2_map = lambda j, i: (i, 0)
        xx2_map = lambda j, i: (0, j)
        o_map = lambda j, i: (i, j)

    # explicit scoped-VMEM limit: v5e defaults to 16 MiB; cap at 48 MiB so we
    # stay inside v7x's 64 MiB physical VMEM.
    vmem_limit = int(min(48 * 1024 * 1024,
                         max(32 * 1024 * 1024, 2 * per_copy + (4 << 20))))

    out = pl.pallas_call(
        _rbf_func_kernel,
        out_shape=jax.ShapeDtypeStruct((M, N), out_dtype),
        grid=grid,
        in_specs=[
            pl.BlockSpec((TM, D_pad), x_map),
            pl.BlockSpec((TN, D_pad), xx_map),
            pl.BlockSpec((TM, 1), x2_map),
            pl.BlockSpec((1, TN), xx2_map),
        ],
        out_specs=pl.BlockSpec((TM, TN), o_map),
        compiler_params=pltpu.CompilerParams(
            dimension_semantics=("parallel", "parallel"),
            vmem_limit_bytes=vmem_limit,
        ),
    )(x_in, xx_in, x2h, xx2h)

    # Kernel.forward's tail (broadcast of a degenerate (.., 1) result) is a
    # no-op for this dense (m, n) composite; output is already unpadded.
    return out


def _reference_forward(x, xx):
    """Pure-JAX reference mirroring the PyTorch composite semantics."""
    x2d = _atleast2d(x).astype(jnp.float32)
    xx2d = _atleast2d(xx).astype(jnp.float32)
    t = x2d.T[:, :, None]        # (d, m, 1)
    tt = xx2d.T[:, None, :]      # (d, 1, n)
    sqd = jnp.sum((t - tt) ** 2, axis=0)             # SqD.get_func  -> (m, n)
    return jnp.exp(-0.5 * sqd)                       # Exp(Mul(Const(-0.5), SqD))


if __name__ == "__main__":
    key = jax.random.PRNGKey(0)
    kx, kxx, kb, kc = jax.random.split(key, 4)

    # --- small test matching the module's expected usage ------------------
    x = jax.random.normal(kx, (8, 32), dtype=jnp.float32)
    xx = jax.random.normal(kxx, (16, 32), dtype=jnp.float32)

    out = jax.block_until_ready(kernel_forward(x, xx))
    ref = _reference_forward(x, xx)
    assert out.shape == (8, 16)
    assert jnp.allclose(out, ref, atol=1e-4, rtol=1e-4)

    # --- multi-tile grid with a ragged M edge (non-divisible blocks) ------
    xb = jax.random.normal(kb, (40, 32), dtype=jnp.float32)
    out_b = jax.block_until_ready(kernel_forward(xb, xx, tm=16, tn=128))
    ref_b = _reference_forward(xb, xx)
    assert out_b.shape == (40, 16)
    assert jnp.allclose(out_b, ref_b, atol=1e-4, rtol=1e-4)

    # --- ragged N edge (masked partial output stores) + D padding (D=40) --
    xc = jax.random.normal(kc, (8, 40), dtype=jnp.float32)
    xxc = jax.random.normal(kxx, (200, 40), dtype=jnp.float32)
    out_c = jax.block_until_ready(kernel_forward(xc, xxc, tm=8, tn=128))
    ref_c = _reference_forward(xc, xxc)
    assert out_c.shape == (8, 200)
    assert jnp.allclose(out_c, ref_c, atol=1e-4, rtol=1e-4)

    # --- self-kernel (xx=None): clamp guarantees K <= 1, diag == 1 --------
    out_s = jax.block_until_ready(kernel_forward(x))
    assert out_s.shape == (8, 8)
    assert jnp.allclose(jnp.diag(out_s), 1.0, atol=1e-4)
    assert float(jnp.max(out_s)) <= 1.0 + 1e-6

    # --- bf16 MXU fast path (wrapper-side cast), looser tolerance ---------
    out_bf = jax.block_until_ready(kernel_forward(x, xx, use_bf16_matmul=True))
    assert jnp.allclose(out_bf, ref, atol=5e-2, rtol=5e-2)

    # --- bf16 output dtype option (halves the output writeback) -----------
    out_o = jax.block_until_ready(kernel_forward(x, xx, out_dtype=jnp.bfloat16))
    assert out_o.dtype == jnp.bfloat16
    assert jnp.allclose(out_o.astype(jnp.float32), ref, atol=1e-2, rtol=1e-2)

    print("KERNEL_OK")
</pallas_src>

<mosaic_0001>
module attributes {stable_mosaic.version = 11 : i64} {
  func.func @_rbf_func_kernel(%arg0: i32, %arg1: i32, %arg2: memref<8x128xf32, #tpu.memory_space<vmem>>, %arg3: memref<16x128xf32, #tpu.memory_space<vmem>>, %arg4: memref<8x1xf32, #tpu.memory_space<vmem>>, %arg5: memref<1x16xf32, #tpu.memory_space<vmem>>, %arg6: memref<8x16xf32, #tpu.memory_space<vmem>>) attributes {dimension_semantics = [#tpu.dimension_semantics<parallel>, #tpu.dimension_semantics<parallel>], iteration_bounds = array<i64: 1, 1>, scalar_prefetch = 0 : i64, scratch_operands = 0 : i64, tpu.core_type = #tpu.core_type<tc>, window_params = [{transform_indices = @transform_0, window_bounds = array<i64: 8, 128>}, {transform_indices = @transform_1, window_bounds = array<i64: 16, 128>}, {transform_indices = @transform_2, window_bounds = array<i64: 8, 1>}, {transform_indices = @transform_3, window_bounds = array<i64: 1, 16>}, {transform_indices = @transform_4, window_bounds = array<i64: 8, 16>}]} {
    %c0 = arith.constant 0 : index
    %c0_0 = arith.constant 0 : index
    %0 = vector.load %arg2[%c0, %c0_0] : memref<8x128xf32, #tpu.memory_space<vmem>>, vector<8x128xf32>
    %c0_1 = arith.constant 0 : index
    %c0_2 = arith.constant 0 : index
    %1 = vector.load %arg3[%c0_1, %c0_2] : memref<16x128xf32, #tpu.memory_space<vmem>>, vector<16x128xf32>
    %cst = arith.constant dense<0.000000e+00> : vector<8x16xf32>
    %2 = tpu.matmul %0, %1, %cst {dimension_numbers = #tpu.dot_dimension_numbers<[1], [1], [0], [0], [0, 0, 1, 0], [], []>} : vector<8x128xf32>, vector<16x128xf32>, vector<8x16xf32> -> vector<8x16xf32>
    %c0_3 = arith.constant 0 : index
    %c0_4 = arith.constant 0 : index
    %3 = vector.load %arg4[%c0_3, %c0_4] : memref<8x1xf32, #tpu.memory_space<vmem>>, vector<8x1xf32>
    %4 = vector.broadcast %3 : vector<8x1xf32> to vector<8x16xf32>
    %5 = arith.addf %2, %4 : vector<8x16xf32>
    %c0_5 = arith.constant 0 : index
    %c0_6 = arith.constant 0 : index
    %6 = vector.load %arg5[%c0_5, %c0_6] : memref<1x16xf32, #tpu.memory_space<vmem>>, vector<1x16xf32>
    %7 = vector.broadcast %6 : vector<1x16xf32> to vector<8x16xf32>
    %8 = arith.addf %5, %7 : vector<8x16xf32>
    %cst_7 = arith.constant 0.000000e+00 : f32
    %9 = vector.broadcast %cst_7 : f32 to vector<8x16xf32>
    %10 = arith.minimumf %8, %9 : vector<8x16xf32>
    %11 = math.exp %10 : vector<8x16xf32>
    %c0_8 = arith.constant 0 : index
    %c0_9 = arith.constant 0 : index
    %12 = vector.load %arg6[%c0_8, %c0_9] : memref<8x16xf32, #tpu.memory_space<vmem>>, vector<8x16xf32>
    tpu.vector_store %arg6[%c0_8, %c0_9], %11 {strides = array<i32>} : memref<8x16xf32, #tpu.memory_space<vmem>>, vector<8x16xf32>,
    return
  }
  func.func @transform_0(%arg0: i32, %arg1: i32) -> (i32, i32) {
    %c0_i32 = arith.constant 0 : i32
    %c0_i32_0 = arith.constant 0 : i32
    return %arg1, %c0_i32 : i32, i32
  }
  func.func @transform_1(%arg0: i32, %arg1: i32) -> (i32, i32) {
    %c0_i32 = arith.constant 0 : i32
    %c0_i32_0 = arith.constant 0 : i32
    return %arg0, %c0_i32 : i32, i32
  }
  func.func @transform_2(%arg0: i32, %arg1: i32) -> (i32, i32) {
    %c0_i32 = arith.constant 0 : i32
    %c0_i32_0 = arith.constant 0 : i32
    return %arg1, %c0_i32 : i32, i32
  }
  func.func @transform_3(%arg0: i32, %arg1: i32) -> (i32, i32) {
    %c0_i32 = arith.constant 0 : i32
    %c0_i32_0 = arith.constant 0 : i32
    return %c0_i32, %arg0 : i32, i32
  }
  func.func @transform_4(%arg0: i32, %arg1: i32) -> (i32, i32) {
    %c0_i32 = arith.constant 0 : i32
    return %arg1, %arg0 : i32, i32
  }
}

</mosaic_0001>

<llo_original>
// kernel: kernel_forward.1
$region0: #{kernel_forward.1}
  #allocation0 [shape = 'u32[]', space=smem, size = 0x4, offset = 0x4, fixed_abs, tag = 'smem constant byte address 0x4 - core index']
  #allocation1 [shape = 'u32[144,128]{1,0:T(1,128)}', space=vmem, size = 0x12000, scoped, tag = 'internal scratch']
  %s0 = inlined_call_operand.vmem [shape: f32[8,128], index: 0, kind: input, shape index: {}]
  %s1 = inlined_call_operand.vmem [shape: f32[16,128], index: 1, kind: input, shape index: {}]
  %s2 = inlined_call_operand.vmem [shape: f32[8,1], index: 2, kind: input, shape index: {}]
  %s3 = inlined_call_operand.vmem [shape: f32[1,16], index: 3, kind: input, shape index: {}]
  %s4 = inlined_call_operand.hbm [shape: f32[8,16], index: 4, kind: output, shape index: {}]
  %s5 = sld [smem:[#allocation0]]
  $region26: #{kernel_forward.1} parent=0
    _
  %s7 = ssub.s32 1, %s5
  %s8 = scalar_select 0, %s7, %s5
  $region1: #{kernel_forward.1} parent=0
    #allocation2 [shape = 'u8[4096]{0}', space=vmem, size = 0x1000, scoped, tag = 'output window, operand 0, single buffered']
    #allocation3 [shape = 's32[1]{0}', space=sflag, size = 0x4, scoped, tag = 'scoped memory for kernel_forward.1']
    %9 = vsyncpa [#allocation3], 0
    // Predicated region
    $region2: #{kernel_forward.1} parent=1 // pred_check
      _
    $region3: #{kernel_forward.1} parent=1 // pred_check_branch
      %11 = sbr.rel (0) target = $region5
    $region4: #{kernel_forward.1} parent=1 // pred_region
      _
    $region5: #{kernel_forward.1} parent=1 // pred_fallthru
      _
    // Predicated region
    $region6: #{kernel_forward.1} parent=1 // pred_check
      _
    $region7: #{kernel_forward.1} parent=1 // pred_check_branch
      %13 = sbr.rel (0) target = $region9
    $region8: #{kernel_forward.1} parent=1 // pred_region
      _
    $region9: #{kernel_forward.1} parent=1 // pred_fallthru
      _
    // Predicated region
    $region10: #{kernel_forward.1} parent=1 // pred_check
      _
    $region11: #{kernel_forward.1} parent=1 // pred_check_branch
      %15 = sbr.rel (0) target = $region13
    $region12: #{kernel_forward.1} parent=1 // pred_region
      _
    $region13: #{kernel_forward.1} parent=1 // pred_fallthru
      _
    // Predicated region
    $region14: #{kernel_forward.1} parent=1 // pred_check
      _
    $region15: #{kernel_forward.1} parent=1 // pred_check_branch
      %17 = sbr.rel (0) target = $region17
    $region16: #{kernel_forward.1} parent=1 // pred_region
      _
    $region17: #{kernel_forward.1} parent=1 // pred_fallthru
      _
    %v18 = vld [vmem:[%s0] sm:$0xff]
    %v19 = vld [vmem:[%s1] sm:$0xff]
    %v20 = vld [vmem:[%s1 + $0x8] sm:$0xff]
    %v21 = vld [vmem:[%s2] sm:$0xff]
    %23 = vset.pattern.permute.xlu0 0
    %24 = vperm.xlu0 %23, %v21
    %v25 = vpop.permute.xlu0 %24
    %27 = vmatprep.subr.mxu0 0.0
    %28 = vmatpush1.xpose.msra.mxu0 %v19
    %29 = vmatprep.subr.mxu0 0.0
    %30 = vmatpush1.xpose.msra.mxu0 %v20
    %31 = vmatprep.subr.mxu0 0.0
    %32 = vmatpush1.xpose.msra.mxu0 0.0
    %33 = vmatprep.subr.mxu0 0.0
    %34 = vmatpush1.xpose.msra.mxu0 0.0
    %35 = vmatprep.subr.mxu0 0.0
    %36 = vmatpush1.xpose.msra.mxu0 0.0
    %37 = vmatprep.subr.mxu0 0.0
    %38 = vmatpush1.xpose.msra.mxu0 0.0
    %39 = vmatprep.subr.mxu0 0.0
    %40 = vmatpush1.xpose.msra.mxu0 0.0
    %41 = vmatprep.subr.mxu0 0.0
    %42 = vmatpush1.xpose.msra.mxu0 0.0
    %43 = vmatprep.subr.mxu0 0.0
    %44 = vmatpush1.xpose.msra.mxu0 0.0
    %45 = vmatprep.subr.mxu0 0.0
    %46 = vmatpush1.xpose.msra.mxu0 0.0
    %47 = vmatprep.subr.mxu0 0.0
    %48 = vmatpush1.xpose.msra.mxu0 0.0
    %49 = vmatprep.subr.mxu0 0.0
    %50 = vmatpush1.xpose.msra.mxu0 0.0
    %51 = vmatprep.subr.mxu0 0.0
    %52 = vmatpush1.xpose.msra.mxu0 0.0
    %53 = vmatprep.subr.mxu0 0.0
    %54 = vmatpush1.xpose.msra.mxu0 0.0
    %55 = vmatprep.subr.mxu0 0.0
    %56 = vmatpush1.xpose.msra.mxu0 0.0
    %57 = vmatprep.subr.mxu0 0.0
    %58 = vmatpush1.xpose.msra.mxu0 0.0
    %59 = vmatprep.subr.mxu0 0.0
    %60 = vmatpush1.xpose.msra.mxu0 0.0
    %61 = vmatprep.subr.mxu0 0.0
    %62 = vmatpush1.xpose.msra.mxu0 0.0
    %63 = vmatprep.subr.mxu0 0.0
    %64 = vmatpush1.xpose.msra.mxu0 0.0
    %65 = vmatprep.subr.mxu0 0.0
    %66 = vmatpush1.xpose.msra.mxu0 0.0
    %67 = vmatprep.subr.mxu0 0.0
    %68 = vmatpush1.xpose.msra.mxu0 0.0
    %69 = vmatprep.subr.mxu0 0.0
    %70 = vmatpush1.xpose.msra.mxu0 0.0
    %71 = vmatprep.subr.mxu0 0.0
    %72 = vmatpush1.xpose.msra.mxu0 0.0
    %73 = vmatprep.subr.mxu0 0.0
    %74 = vmatpush1.xpose.msra.mxu0 0.0
    %75 = vmatprep.subr.mxu0 0.0
    %76 = vmatpush1.xpose.msra.mxu0 0.0
    %77 = vmatprep.subr.mxu0 0.0
    %78 = vmatpush1.xpose.msra.mxu0 0.0
    %79 = vmatprep.subr.mxu0 0.0
    %80 = vmatpush1.xpose.msra.mxu0 0.0
    %81 = vmatprep.subr.mxu0 0.0
    %82 = vmatpush1.xpose.msra.mxu0 0.0
    %83 = vmatprep.subr.mxu0 0.0
    %84 = vmatpush1.xpose.msra.mxu0 0.0
    %85 = vmatprep.subr.mxu0 0.0
    %86 = vmatpush1.xpose.msra.mxu0 0.0
    %87 = vmatprep.subr.mxu0 0.0
    %88 = vmatpush1.xpose.msra.mxu0 0.0
    %89 = vmatprep.subr.mxu0 0.0
    %90 = vmatpush1.xpose.msra.mxu0 0.0
    %91 = vmatprep.mubr.f32.mxu0 0.0
    %92 = vmatmul.mubr.f32.gmra.mrb[0].mxu0 %v18
    %v93 = vpop.f32.mrb[0].mxu0
    %v94 = vadd.f32 %v25, %v93
    %v95 = vpop.f32.mrb[0].mxu0
    %96 = vdwg.mxu0
    %v97 = vld [vmem:[%s3] sm:$0x1]
    %v99 = vlaneseq
    %v100 = vshrl.u32 %v99, 7
    %v101 = vsub.s32 0, %v100
    %v102 = vrot.slane %v97, %v101
    %v104 = vadd.f32 %v94, %v102
    %v105 = vmin.f32 %v104, 0.0
    %v106 = vmul.f32 %v105, 1.442695
    %v107 = vpow.pop %v106
    %vm108 = vcmask 130048
    %109 = vst.msk [vmem:[#allocation2] sm:$0xff] %vm108, %v107
    // Predicated region
    $region18: #{kernel_forward.1} parent=1 // pred_check
      _
    $region19: #{kernel_forward.1} parent=1 // pred_check_branch
      %111 = sbr.rel (0) target = $region21
    $region20: #{kernel_forward.1} parent=1 // pred_region
      %s113 = ssub.s32 128, 128
      %114 = vsyncadd [#allocation3], %s113
      %s116 = sshll.u32 [#allocation2], 4
      %s117 = int_to_ptr.vmem [resolvable:$true] %s116
      %119 = dma.vmem_to_hbm [thread:$0]  %s117, 128, %s4, [#allocation3]
    $region21: #{kernel_forward.1} parent=1 // pred_fallthru
      _
    // Predicated region
    $region22: #{kernel_forward.1} parent=1 // pred_check
      _
    $region23: #{kernel_forward.1} parent=1 // pred_check_branch
      %121 = sbr.rel (0) target = $region25
    $region24: #{kernel_forward.1} parent=1 // pred_region
      %122 = dma.done [#allocation3], 128
    $region25: #{kernel_forward.1} parent=1 // pred_fallthru
      _
    %123 = vsyncpa [#allocation3], 1

</llo_original>
